<compile_context>
chip_gen: v6e
topology: v6e:2x2x1
jax: 0.10.0
libtpu: 0.0.40
codegen_flags: <defaults>
</compile_context>

<pallas_src>
import functools
import math

import jax
import jax.numpy as jnp
from jax.experimental import pallas as pl
from jax.experimental.pallas import tpu as pltpu


def _round_up(x, m):
    return (x + m - 1) // m * m


def _sage_gcn_layer_kernel(a_ref, hsrc_ref, hdst_ref, w_ref, b_ref, o_ref, acc_ref,
                           *, deg_col, apply_relu):
    k = pl.program_id(1)

    @pl.when(k == 0)
    def _():
        acc_ref[...] = jnp.zeros_like(acc_ref)

    # Neighbor sum (and, via the appended ones column, the in-degree) on the MXU.
    # bf16 operands, f32 accumulation.
    acc_ref[...] += jnp.dot(a_ref[...], hsrc_ref[...], preferred_element_type=jnp.float32)

    @pl.when(k == pl.num_programs(1) - 1)
    def _():
        # Add the self term; its ones column also supplies the "+1" of the degree.
        tot = acc_ref[...] + hdst_ref[...].astype(jnp.float32)          # (tm, Fp)
        deg_p1 = tot[:, deg_col:deg_col + 1]                            # (tm, 1), >= 1
        agg = tot * pl.reciprocal(deg_p1, approx=True)                  # EUP, frees VALU
        # fc_neigh + module bias; W rows of the ones/pad columns are zero.
        out = jnp.dot(agg, w_ref[...], preferred_element_type=jnp.float32) + b_ref[...]
        if apply_relu:
            out = jnp.maximum(out, 0.0)
        o_ref[...] = out.astype(o_ref.dtype)


def sage_gcn_layer(a, h_aug, w, b, *, deg_col, apply_relu, tm=128, tk=128):
    npad = a.shape[0]
    f_aug = h_aug.shape[1]
    f_out = w.shape[1]
    grid = (npad // tm, npad // tk)

    kernel = functools.partial(_sage_gcn_layer_kernel, deg_col=deg_col, apply_relu=apply_relu)
    return pl.pallas_call(
        kernel,
        out_shape=jax.ShapeDtypeStruct((npad, f_out), jnp.float32),
        grid_spec=pltpu.PrefetchScalarGridSpec(
            num_scalar_prefetch=0,
            grid=grid,
            in_specs=[
                pl.BlockSpec((tm, tk), lambda i, k: (i, k)),        # A tile (streamed)
                pl.BlockSpec((tk, f_aug), lambda i, k: (k, 0)),     # H_aug src tile (streamed)
                pl.BlockSpec((tm, f_aug), lambda i, k: (i, 0)),     # H_aug dst tile (self term)
                pl.BlockSpec((f_aug, f_out), lambda i, k: (0, 0)),  # W: resident across grid
                pl.BlockSpec((1, f_out), lambda i, k: (0, 0)),      # b: resident across grid
            ],
            out_specs=pl.BlockSpec((tm, f_out), lambda i, k: (i, 0)),
            scratch_shapes=[pltpu.VMEM((tm, f_aug), jnp.float32)],  # neighbor-sum accumulator
        ),
        compiler_params=pltpu.CompilerParams(
            dimension_semantics=("parallel", "arbitrary"),
            vmem_limit_bytes=64 * 1024 * 1024,
        ),
    )(a, h_aug, h_aug, w, b)


def sage_forward(adj, x, params, *, tm=128, tk=128):
    n, in_size = x.shape
    hid = params["w1"].shape[1]
    out_size = params["w2"].shape[1]

    npad = _round_up(n, math.lcm(tm, tk))
    fp0 = _round_up(in_size + 1, 128)   # layer-1 input width ([x | 1 | 0-pad])
    hp1 = _round_up(hid + 1, 128)       # layer-1 output / layer-2 input width ([h | 1 | 0-pad])
    op = _round_up(out_size, 128)       # layer-2 output width (lane-dense)

    # Dense adjacency, zero-padded, bf16 (0/1 exact in bf16 -> halves the dominant stream).
    a = jnp.zeros((npad, npad), jnp.bfloat16).at[:n, :n].set(adj.astype(jnp.bfloat16))

    # Layer-1 input with the ones column (fused degree) at col `in_size`; padded rows keep the
    # ones column so deg+1 >= 1 everywhere (no inf/nan on padding).
    h0 = jnp.zeros((npad, fp0), jnp.float32)
    h0 = h0.at[:n, :in_size].set(x)
    h0 = h0.at[:, in_size].set(1.0)
    h0 = h0.astype(jnp.bfloat16)

    # Padded weights/biases.  b1[ones-col] = 1 so layer-1's output already carries the ones
    # column needed for layer-2's fused degree (relu(1) == 1, W2 row of that column is zero).
    w1 = jnp.zeros((fp0, hp1), jnp.float32).at[:in_size, :hid].set(params["w1"])
    b1 = jnp.zeros((1, hp1), jnp.float32).at[:, :hid].set(params["b1"]).at[:, hid].set(1.0)
    w2 = jnp.zeros((hp1, op), jnp.float32).at[:hid, :out_size].set(params["w2"])
    b2 = jnp.zeros((1, op), jnp.float32).at[:, :out_size].set(params["b2"])

    # self.dropout(x) -> identity (eval mode)
    h1 = sage_gcn_layer(a, h0, w1, b1, deg_col=in_size, apply_relu=True, tm=tm, tk=tk)
    # dropout -> identity (eval mode)
    h1 = h1.astype(jnp.bfloat16)  # stream layer-2 features in bf16 (f32 accumulation in-kernel)
    h2 = sage_gcn_layer(a, h1, w2, b2, deg_col=hid, apply_relu=False, tm=tm, tk=tk)
    return h2[:n, :out_size]


def _reference(adj, x, params):
    # Pure-JAX reference replicating the kernel's bf16 rounding of the streamed features
    # (accumulation stays f32), but with an exact divide instead of the approx reciprocal.
    a = adj.astype(jnp.float32)
    deg = jnp.sum(a, axis=-1, keepdims=True)
    xb = x.astype(jnp.bfloat16).astype(jnp.float32)
    h = (a @ xb + xb) / (deg + 1.0)
    h = jnp.maximum(h @ params["w1"] + params["b1"], 0.0)
    hb = h.astype(jnp.bfloat16).astype(jnp.float32)
    h = (a @ hb + hb) / (deg + 1.0)
    h = h @ params["w2"] + params["b2"]
    return h


if __name__ == "__main__":
    # Small but non-trivial: N=300 pads to 384 -> 3x3 grid exercises the K-accumulator path.
    N, IN_SIZE, HID_SIZE, OUT_SIZE = 300, 32, 32, 16

    key = jax.random.PRNGKey(0)
    k_adj, k_x, k_w1, k_b1, k_w2, k_b2 = jax.random.split(key, 6)

    # Dense adjacency: A[d, s] = 1.0 if edge s->d (no self-loops assumed, as in DGL blocks).
    adj = jax.random.bernoulli(k_adj, p=0.05, shape=(N, N)).astype(jnp.float32)
    x = jax.random.normal(k_x, (N, IN_SIZE), dtype=jnp.float32)

    params = {
        "w1": jax.random.normal(k_w1, (IN_SIZE, HID_SIZE), jnp.float32)
        * (1.0 / jnp.sqrt(IN_SIZE)),
        "b1": jax.random.normal(k_b1, (1, HID_SIZE), jnp.float32) * 0.01,
        "w2": jax.random.normal(k_w2, (HID_SIZE, OUT_SIZE), jnp.float32)
        * (1.0 / jnp.sqrt(HID_SIZE)),
        "b2": jax.random.normal(k_b2, (1, OUT_SIZE), jnp.float32) * 0.01,
    }

    out = sage_forward(adj, x, params, tm=128, tk=128)
    out = jax.block_until_ready(out)

    ref = _reference(adj, x, params)
    assert out.shape == (N, OUT_SIZE)
    assert jnp.allclose(out, ref, atol=1e-2, rtol=1e-2), "mismatch vs reference"

    print("KERNEL_OK")
</pallas_src>

<mosaic_0001>
module attributes {stable_mosaic.version = 11 : i64} {
  func.func @_sage_gcn_layer_kernel(%arg0: i32, %arg1: i32, %arg2: memref<128x128xbf16, #tpu.memory_space<vmem>>, %arg3: memref<128x128xbf16, #tpu.memory_space<vmem>>, %arg4: memref<128x128xbf16, #tpu.memory_space<vmem>>, %arg5: memref<128x128xf32, #tpu.memory_space<vmem>>, %arg6: memref<1x128xf32, #tpu.memory_space<vmem>>, %arg7: memref<128x128xf32, #tpu.memory_space<vmem>>, %arg8: memref<128x128xf32, #tpu.memory_space<vmem>>) attributes {dimension_semantics = [#tpu.dimension_semantics<parallel>, #tpu.dimension_semantics<arbitrary>], iteration_bounds = array<i64: 3, 3>, scalar_prefetch = 0 : i64, scratch_operands = 1 : i64, tpu.core_type = #tpu.core_type<tc>, window_params = [{transform_indices = @transform_0, window_bounds = array<i64: 128, 128>}, {transform_indices = @transform_1, window_bounds = array<i64: 128, 128>}, {transform_indices = @transform_2, window_bounds = array<i64: 128, 128>}, {pipeline_mode = #tpu.pipeline_mode<synchronous>, transform_indices = @transform_3, window_bounds = array<i64: 128, 128>}, {pipeline_mode = #tpu.pipeline_mode<synchronous>, transform_indices = @transform_4, window_bounds = array<i64: 1, 128>}, {transform_indices = @transform_5, window_bounds = array<i64: 128, 128>}]} {
    %c0_i32 = arith.constant 0 : i32
    %0 = arith.cmpi eq, %arg1, %c0_i32 : i32
    %1 = arith.extui %0 : i1 to i32
    %c0_i32_0 = arith.constant 0 : i32
    %2 = arith.cmpi ne, %1, %c0_i32_0 : i32
    scf.if %2 {
      %cst_9 = arith.constant 0.000000e+00 : f32
      %12 = vector.broadcast %cst_9 : f32 to vector<128x128xf32>
      %c0_10 = arith.constant 0 : index
      %c0_11 = arith.constant 0 : index
      %13 = vector.load %arg8[%c0_10, %c0_11] : memref<128x128xf32, #tpu.memory_space<vmem>>, vector<128x128xf32>
      tpu.vector_store %arg8[%c0_10, %c0_11], %12 {strides = array<i32>} : memref<128x128xf32, #tpu.memory_space<vmem>>, vector<128x128xf32>,
    } else {
    }
    %c0 = arith.constant 0 : index
    %c0_1 = arith.constant 0 : index
    %3 = vector.load %arg8[%c0, %c0_1] : memref<128x128xf32, #tpu.memory_space<vmem>>, vector<128x128xf32>
    %c0_2 = arith.constant 0 : index
    %c0_3 = arith.constant 0 : index
    %4 = vector.load %arg2[%c0_2, %c0_3] : memref<128x128xbf16, #tpu.memory_space<vmem>>, vector<128x128xbf16>
    %c0_4 = arith.constant 0 : index
    %c0_5 = arith.constant 0 : index
    %5 = vector.load %arg3[%c0_4, %c0_5] : memref<128x128xbf16, #tpu.memory_space<vmem>>, vector<128x128xbf16>
    %cst = arith.constant dense<0.000000e+00> : vector<128x128xf32>
    %6 = tpu.matmul %4, %5, %cst {dimension_numbers = #tpu.dot_dimension_numbers<[1], [0], [0], [1], [0, 0, 1, 1], [], []>} : vector<128x128xbf16>, vector<128x128xbf16>, vector<128x128xf32> -> vector<128x128xf32>
    %7 = arith.addf %3, %6 : vector<128x128xf32>
    %c0_6 = arith.constant 0 : index
    %c0_7 = arith.constant 0 : index
    %8 = vector.load %arg8[%c0_6, %c0_7] : memref<128x128xf32, #tpu.memory_space<vmem>>, vector<128x128xf32>
    tpu.vector_store %arg8[%c0_6, %c0_7], %7 {strides = array<i32>} : memref<128x128xf32, #tpu.memory_space<vmem>>, vector<128x128xf32>,
    %c2_i32 = arith.constant 2 : i32
    %9 = arith.cmpi eq, %arg1, %c2_i32 : i32
    %10 = arith.extui %9 : i1 to i32
    %c0_i32_8 = arith.constant 0 : i32
    %11 = arith.cmpi ne, %10, %c0_i32_8 : i32
    scf.if %11 {
      %c0_9 = arith.constant 0 : index
      %c0_10 = arith.constant 0 : index
      %12 = vector.load %arg8[%c0_9, %c0_10] : memref<128x128xf32, #tpu.memory_space<vmem>>, vector<128x128xf32>
      %c0_11 = arith.constant 0 : index
      %c0_12 = arith.constant 0 : index
      %13 = vector.load %arg4[%c0_11, %c0_12] : memref<128x128xbf16, #tpu.memory_space<vmem>>, vector<128x128xbf16>
      %14 = arith.extf %13 : vector<128x128xbf16> to vector<128x128xf32>
      %15 = arith.addf %12, %14 : vector<128x128xf32>
      %16 = vector.extract_strided_slice %15 {offsets = [0, 32], sizes = [128, 1], strides = [1, 1]} : vector<128x128xf32> to vector<128x1xf32>
      %17 = tpu.reciprocal %16 {approx = true} : vector<128x1xf32> -> vector<128x1xf32>
      %18 = vector.broadcast %17 : vector<128x1xf32> to vector<128x128xf32>
      %19 = arith.mulf %15, %18 : vector<128x128xf32>
      %c0_13 = arith.constant 0 : index
      %c0_14 = arith.constant 0 : index
      %20 = vector.load %arg5[%c0_13, %c0_14] : memref<128x128xf32, #tpu.memory_space<vmem>>, vector<128x128xf32>
      %cst_15 = arith.constant dense<0.000000e+00> : vector<128x128xf32>
      %21 = tpu.matmul %19, %20, %cst_15 {dimension_numbers = #tpu.dot_dimension_numbers<[1], [0], [0], [1], [0, 0, 1, 1], [], []>} : vector<128x128xf32>, vector<128x128xf32>, vector<128x128xf32> -> vector<128x128xf32>
      %c0_16 = arith.constant 0 : index
      %c0_17 = arith.constant 0 : index
      %22 = vector.load %arg6[%c0_16, %c0_17] : memref<1x128xf32, #tpu.memory_space<vmem>>, vector<1x128xf32>
      %23 = vector.broadcast %22 : vector<1x128xf32> to vector<128x128xf32>
      %24 = arith.addf %21, %23 : vector<128x128xf32>
      %cst_18 = arith.constant 0.000000e+00 : f32
      %25 = vector.broadcast %cst_18 : f32 to vector<128x128xf32>
      %26 = arith.maximumf %24, %25 : vector<128x128xf32>
      %c0_19 = arith.constant 0 : index
      %c0_20 = arith.constant 0 : index
      %27 = vector.load %arg7[%c0_19, %c0_20] : memref<128x128xf32, #tpu.memory_space<vmem>>, vector<128x128xf32>
      tpu.vector_store %arg7[%c0_19, %c0_20], %26 {strides = array<i32>} : memref<128x128xf32, #tpu.memory_space<vmem>>, vector<128x128xf32>,
    } else {
    }
    return
  }
  func.func @transform_0(%arg0: i32, %arg1: i32) -> (i32, i32) {
    %c0_i32 = arith.constant 0 : i32
    return %arg0, %arg1 : i32, i32
  }
  func.func @transform_1(%arg0: i32, %arg1: i32) -> (i32, i32) {
    %c0_i32 = arith.constant 0 : i32
    %c0_i32_0 = arith.constant 0 : i32
    return %arg1, %c0_i32 : i32, i32
  }
  func.func @transform_2(%arg0: i32, %arg1: i32) -> (i32, i32) {
    %c0_i32 = arith.constant 0 : i32
    %c0_i32_0 = arith.constant 0 : i32
    return %arg0, %c0_i32 : i32, i32
  }
  func.func @transform_3(%arg0: i32, %arg1: i32) -> (i32, i32) {
    %c0_i32 = arith.constant 0 : i32
    %c0_i32_0 = arith.constant 0 : i32
    %c0_i32_1 = arith.constant 0 : i32
    return %c0_i32, %c0_i32_0 : i32, i32
  }
  func.func @transform_4(%arg0: i32, %arg1: i32) -> (i32, i32) {
    %c0_i32 = arith.constant 0 : i32
    %c0_i32_0 = arith.constant 0 : i32
    %c0_i32_1 = arith.constant 0 : i32
    return %c0_i32, %c0_i32_0 : i32, i32
  }
  func.func @transform_5(%arg0: i32, %arg1: i32) -> (i32, i32) {
    %c0_i32 = arith.constant 0 : i32
    %c0_i32_0 = arith.constant 0 : i32
    return %arg0, %c0_i32 : i32, i32
  }
}

</mosaic_0001>

<llo_original>
// kernel: tpu_custom_call.1
$region0: #{tpu_custom_call.1}
  #allocation0 [shape = 'u32[]', space=smem, size = 0x4, offset = 0x4, fixed_abs, tag = 'smem constant byte address 0x4 - core index']
  #allocation1 [shape = 'u32[144,128]{1,0:T(1,128)}', space=vmem, size = 0x12000, scoped, tag = 'internal scratch']
  #allocation2 [shape = 'f32[128,128]{1,0:T(8,128)}', space=vmem, size = 0x10000, scoped, tag = 'scratch operand']
  %s0 = inlined_call_operand.hbm [shape: bf16[384,384], index: 0, kind: input, shape index: {}]
  %s1 = inlined_call_operand.hbm [shape: bf16[384,128], index: 1, kind: input, shape index: {}]
  %s2 = inlined_call_operand.hbm [shape: bf16[384,128], index: 2, kind: input, shape index: {}]
  %s3 = inlined_call_operand.hbm [shape: f32[128,128], index: 3, kind: input, shape index: {}]
  %s4 = inlined_call_operand.vmem [shape: f32[1,128], index: 4, kind: input, shape index: {}]
  %s5 = inlined_call_operand.hbm [shape: f32[384,128], index: 5, kind: output, shape index: {}]
  %s6 = sld [smem:[#allocation0]]
  $region77: #{tpu_custom_call.1} parent=0
    _
  %s8 = ssub.s32 1, %s6
  %s9 = scalar_select 0, %s8, %s6
  $region1: #{tpu_custom_call.1} parent=0
    #allocation3 [shape = 'u8[65536]{0}', space=vmem, size = 0x10000, scoped, tag = 'input window, operand 0']
    #allocation4 [shape = 's32[2]{0}', space=sflag, size = 0x8, scoped, tag = 'scoped memory for tpu_custom_call.1']
    #allocation5 [shape = 's32[2]{0}', space=sflag, size = 0x8, scoped, tag = 'scoped memory for tpu_custom_call.1']
    #allocation6 [shape = 'u8[65536]{0}', space=vmem, size = 0x10000, scoped, tag = 'input window, operand 1']
    #allocation7 [shape = 's32[2]{0}', space=sflag, size = 0x8, scoped, tag = 'scoped memory for tpu_custom_call.1']
    #allocation8 [shape = 'u8[65536]{0}', space=vmem, size = 0x10000, scoped, tag = 'input window, operand 2']
    #allocation9 [shape = 'u8[65536]{0}', space=vmem, size = 0x10000, scoped, tag = 'input window, operand 3, single buffered']
    #allocation10 [shape = 's32[1]{0}', space=sflag, size = 0x4, scoped, tag = 'scoped memory for tpu_custom_call.1']
    #allocation11 [shape = 'u8[131072]{0}', space=vmem, size = 0x20000, scoped, tag = 'output window, operand 0']
    %10 = vsyncpa [#allocation4], 0
    %s11 = scalar_lea.sflag [#allocation4], 1
    %12 = vsyncpa %s11, 0
    %13 = vsyncpa [#allocation7], 0
    %s14 = scalar_lea.sflag [#allocation7], 1
    %15 = vsyncpa %s14, 0
    %16 = vsyncpa [#allocation10], 0
    %17 = vsyncpa [#allocation5], 0
    %s18 = scalar_lea.sflag [#allocation5], 1
    %19 = vsyncpa %s18, 0
    loop: start=0, step=1, limit=11
    $region2: #{tpu_custom_call.1} parent=1 // loop_pre_header
      _
    $region3: #{tpu_custom_call.1} parent=1 // loop_header
      %s21 = sphi 0, %s25
      %p22 = scmp.ge.s32.totalorder %s21, 11
      %s28 = sphi 0, %s40
      %s29 = sphi 0, %s36
      %s30 = sphi 0, %s28
      %s31 = sphi 0, %s29
      %s32 = sphi 0, %s30
      %s33 = sphi 0, %s31
      %s45 = sphi 0, %s47
      %s48 = sphi 0, %s45
      %s49 = sphi 0, %s48
      %s65 = sphi 0, %s49
      %s71 = sphi 0, %s73
      %s74 = sphi 0, %s71
      %s75 = sphi 0, %s74
      %s91 = sphi 0, %s75
      %s97 = sphi 0, %s99
      %s100 = sphi 0, %s97
      %s101 = sphi 0, %s100
      %s117 = sphi 0, %s101
      %s121 = sphi 0, %s121
      %s123 = sphi 0, %s121
      %s124 = sphi 0, %s123
      %s138 = sphi 0, %s124
      %s142 = sphi 0, %s142
      %s144 = sphi 0, %s142
      %s145 = sphi 0, %s144
      %s159 = sphi 0, %s145
      %s165 = sphi 0, %s167
      %s168 = sphi 0, %s165
      %s169 = sphi 0, %s168
      %s185 = sphi 0, %s169
    $region4: #{tpu_custom_call.1} parent=1 // loop_header_branch
      %24 = sbr.rel (%p22) target = $region8
    $region5: #{tpu_custom_call.1} parent=1 // loop_body
      %s26 = ssub.s32 %s21, 1
      %s27 = ssub.s32 %s21, 2
      %s34 = sadd.s32 1, %s29
      %p35 = scmp.ge.s32.totalorder %s34, 3
      %s36 = scalar_select %p35, 0, %s34
      %s37 = sadd.s32 1, %s28
      %s38 = scalar_select %p35, %s37, %s28
      %p39 = scmp.ge.s32.totalorder %s38, 3
      %s40 = scalar_select %p39, 0, %s38
      %s41 = ssub.s32 %s28, %s40
      %s42 = ssub.s32 %s29, %s36
      %s43 = sor.u32 %s41, %s42
      %p44 = scmp.eq.s32.totalorder %s43, 0
      %s46 = sadd.s32 %s45, 1
      %s47 = scalar_select %p44, %s45, %s46
      %p50 = pneg %p44
      %p51 = scmp.eq.s32.totalorder %s21, 8
      %p52 = por %p50, %p51
      %p53 = scmp.ne.s32.totalorder %s45, %s48
      %p54 = scmp.eq.s32.totalorder %s21, 0
      %p55 = por %p53, %p54
      %p56 = scmp.ne.s32.totalorder %s45, %s48
      %p57 = scmp.eq.s32.totalorder %s26, 8
      %p58 = por %p56, %p57
      %p59 = scmp.ne.s32.totalorder %s48, %s49
      %p60 = scmp.eq.s32.totalorder %s26, 0
      %p61 = por %p59, %p60
      %p62 = scmp.ne.s32.totalorder %s48, %s49
      %p63 = scmp.eq.s32.totalorder %s27, 8
      %p64 = por %p62, %p63
      %p66 = scmp.ne.s32.totalorder %s49, %s65
      %p67 = scmp.eq.s32.totalorder %s27, 0
      %p68 = por %p66, %p67
      %s69 = ssub.s32 %s29, %s36
      %p70 = scmp.eq.s32.totalorder %s69, 0
      %s72 = sadd.s32 %s71, 1
      %s73 = scalar_select %p70, %s71, %s72
      %p76 = pneg %p70
      %p77 = scmp.eq.s32.totalorder %s21, 8
      %p78 = por %p76, %p77
      %p79 = scmp.ne.s32.totalorder %s71, %s74
      %p80 = scmp.eq.s32.totalorder %s21, 0
      %p81 = por %p79, %p80
      %p82 = scmp.ne.s32.totalorder %s71, %s74
      %p83 = scmp.eq.s32.totalorder %s26, 8
      %p84 = por %p82, %p83
      %p85 = scmp.ne.s32.totalorder %s74, %s75
      %p86 = scmp.eq.s32.totalorder %s26, 0
      %p87 = por %p85, %p86
      %p88 = scmp.ne.s32.totalorder %s74, %s75
      %p89 = scmp.eq.s32.totalorder %s27, 8
      %p90 = por %p88, %p89
      %p92 = scmp.ne.s32.totalorder %s75, %s91
      %p93 = scmp.eq.s32.totalorder %s27, 0
      %p94 = por %p92, %p93
      %s95 = ssub.s32 %s28, %s40
      %p96 = scmp.eq.s32.totalorder %s95, 0
      %s98 = sadd.s32 %s97, 1
      %s99 = scalar_select %p96, %s97, %s98
      %p102 = pneg %p96
      %p103 = scmp.eq.s32.totalorder %s21, 8
      %p104 = por %p102, %p103
      %p105 = scmp.ne.s32.totalorder %s97, %s100
      %p106 = scmp.eq.s32.totalorder %s21, 0
      %p107 = por %p105, %p106
      %p108 = scmp.ne.s32.totalorder %s97, %s100
      %p109 = scmp.eq.s32.totalorder %s26, 8
      %p110 = por %p108, %p109
      %p111 = scmp.ne.s32.totalorder %s100, %s101
      %p112 = scmp.eq.s32.totalorder %s26, 0
      %p113 = por %p111, %p112
      %p114 = scmp.ne.s32.totalorder %s100, %s101
      %p115 = scmp.eq.s32.totalorder %s27, 8
      %p116 = por %p114, %p115
      %p118 = scmp.ne.s32.totalorder %s101, %s117
      %p119 = scmp.eq.s32.totalorder %s27, 0
      %p120 = por %p118, %p119
      %s122 = sadd.s32 %s121, 1
      %p125 = scmp.eq.s32.totalorder %s21, 8
      %p126 = scmp.ne.s32.totalorder %s121, %s123
      %p127 = scmp.eq.s32.totalorder %s21, 0
      %p128 = por %p126, %p127
      %p129 = scmp.ne.s32.totalorder %s121, %s123
      %p130 = scmp.eq.s32.totalorder %s26, 8
      %p131 = por %p129, %p130
      %p132 = scmp.ne.s32.totalorder %s123, %s124
      %p133 = scmp.eq.s32.totalorder %s26, 0
      %p134 = por %p132, %p133
      %p135 = scmp.ne.s32.totalorder %s123, %s124
      %p136 = scmp.eq.s32.totalorder %s27, 8
      %p137 = por %p135, %p136
      %p139 = scmp.ne.s32.totalorder %s124, %s138
      %p140 = scmp.eq.s32.totalorder %s27, 0
      %p141 = por %p139, %p140
      %s143 = sadd.s32 %s142, 1
      %p146 = scmp.eq.s32.totalorder %s21, 8
      %p147 = scmp.ne.s32.totalorder %s142, %s144
      %p148 = scmp.eq.s32.totalorder %s21, 0
      %p149 = por %p147, %p148
      %p150 = scmp.ne.s32.totalorder %s142, %s144
      %p151 = scmp.eq.s32.totalorder %s26, 8
      %p152 = por %p150, %p151
      %p153 = scmp.ne.s32.totalorder %s144, %s145
      %p154 = scmp.eq.s32.totalorder %s26, 0
      %p155 = por %p153, %p154
      %p156 = scmp.ne.s32.totalorder %s144, %s145
      %p157 = scmp.eq.s32.totalorder %s27, 8
      %p158 = por %p156, %p157
      %p160 = scmp.ne.s32.totalorder %s145, %s159
      %p161 = scmp.eq.s32.totalorder %s27, 0
      %p162 = por %p160, %p161
      %s163 = ssub.s32 %s28, %s40
      %p164 = scmp.eq.s32.totalorder %s163, 0
      %s166 = sadd.s32 %s165, 1
      %s167 = scalar_select %p164, %s165, %s166
      %p170 = pneg %p164
      %p171 = scmp.eq.s32.totalorder %s21, 8
      %p172 = por %p170, %p171
      %p173 = scmp.ne.s32.totalorder %s165, %s168
      %p174 = scmp.eq.s32.totalorder %s21, 0
      %p175 = por %p173, %p174
      %p176 = scmp.ne.s32.totalorder %s165, %s168
      %p177 = scmp.eq.s32.totalorder %s26, 8
      %p178 = por %p176, %p177
      %p179 = scmp.ne.s32.totalorder %s168, %s169
      %p180 = scmp.eq.s32.totalorder %s26, 0
      %p181 = por %p179, %p180
      %p182 = scmp.ne.s32.totalorder %s168, %s169
      %p183 = scmp.eq.s32.totalorder %s27, 8
      %p184 = por %p182, %p183
      %p186 = scmp.ne.s32.totalorder %s169, %s185
      %p187 = scmp.eq.s32.totalorder %s27, 0
      %p188 = por %p186, %p187
      %p189 = scmp.le.s32.totalorder 1, %s21
      %p190 = scmp.lt.s32.totalorder %s21, 10
      %p191 = pnand %p189, %p190
      %p192 = pneg %p191
      // Predicated region
      $region9: #{tpu_custom_call.1} parent=5 // pred_check
        _
      $region10: #{tpu_custom_call.1} parent=5 // pred_check_branch
        %194 = sbr.rel (%p191) target = $region12
      $region11: #{tpu_custom_call.1} parent=5 // pred_region
        %s195 = ssub.s32 %s21, 1
        // Predicated region
        $region13: #{tpu_custom_call.1} parent=11 // pred_check
          %p196 = pneg %p134
        $region14: #{tpu_custom_call.1} parent=11 // pred_check_branch
          %198 = sbr.rel (%p196) target = $region16
        $region15: #{tpu_custom_call.1} parent=11 // pred_region
          %s200 = ssub.s32 2048, 2048
          %201 = vsyncadd [#allocation10], %s200
          %s202 = sshll.u32 [#allocation9], 4
          %s203 = int_to_ptr.vmem [resolvable:$true] %s202
          %208 = dma.hbm_to_vmem [thread:$0]  %s3, 2048, %s203, [#allocation10], 128, 128, 8
        $region16: #{tpu_custom_call.1} parent=11 // pred_fallthru
          _
        // Predicated region
        $region17: #{tpu_custom_call.1} parent=11 // pred_check
          %p209 = pneg %p155
        $region18: #{tpu_custom_call.1} parent=11 // pred_check_branch
          %211 = sbr.rel (%p209) target = $region20
        $region19: #{tpu_custom_call.1} parent=11 // pred_region
          _
        $region20: #{tpu_custom_call.1} parent=11 // pred_fallthru
          _
      $region12: #{tpu_custom_call.1} parent=5 // pred_fallthru
        _
      %p212 = scmp.lt.s32.totalorder %s21, 9
      // Predicated region
      $region21: #{tpu_custom_call.1} parent=5 // pred_check
        %p213 = pneg %p212
      $region22: #{tpu_custom_call.1} parent=5 // pred_check_branch
        %215 = sbr.rel (%p213) target = $region24
      $region23: #{tpu_custom_call.1} parent=5 // pred_region
        // Predicated region
        $region25: #{tpu_custom_call.1} parent=23 // pred_check
          %p216 = pneg %p55
        $region26: #{tpu_custom_call.1} parent=23 // pred_check_branch
          %218 = sbr.rel (%p216) target = $region28
        $region27: #{tpu_custom_call.1} parent=23 // pred_region
          %s219 = sand.u32 %s45, 1
          %s220 = scalar_lea.sflag [#allocation4], %s219
          %s221 = sand.u32 %s45, 1
          %s222 = smul.addr %s221, 64
          %s223 = scalar_lea.vmem [#allocation3], %s222
          %s224 = smul.u32 16, %s28
          %s226 = ssub.s32 1024, 1024
          %227 = vsyncadd %s220, %s226
          %s228 = smul.addr %s224, 3
          %s229 = sadd.s32 %s29, %s228
          %s230 = smul.addr %s229, 64
          %s231 = scalar_lea.hbm %s0, %s230
          %s232 = sshll.u32 %s223, 4
          %s233 = int_to_ptr.vmem [resolvable:$true] %s232
          %238 = dma.hbm_to_vmem [thread:$0]  %s231, 1024, %s233, %s220, 192, 64, 4
        $region28: #{tpu_custom_call.1} parent=23 // pred_fallthru
          _
        // Predicated region
        $region29: #{tpu_custom_call.1} parent=23 // pred_check
          %p239 = pneg %p81
        $region30: #{tpu_custom_call.1} parent=23 // pred_check_branch
          %241 = sbr.rel (%p239) target = $region32
        $region31: #{tpu_custom_call.1} parent=23 // pred_region
          %s242 = sand.u32 %s21, 1
          %s243 = scalar_lea.sflag [#allocation7], %s242
          %s244 = sand.u32 %s71, 1
          %s245 = smul.addr %s244, 64
          %s246 = scalar_lea.vmem [#allocation6], %s245
          %s247 = smul.u32 16, %s29
          %s249 = ssub.s32 1024, 1024
          %250 = vsyncadd %s243, %s249
          %s251 = smul.addr %s247, 64
          %s252 = scalar_lea.hbm %s1, %s251
          %s253 = sshll.u32 %s246, 4
          %s254 = int_to_ptr.vmem [resolvable:$true] %s253
          %259 = dma.hbm_to_vmem [thread:$0]  %s252, 1024, %s254, %s243, 64, 64, 4
        $region32: #{tpu_custom_call.1} parent=23 // pred_fallthru
          _
        // Predicated region
        $region33: #{tpu_custom_call.1} parent=23 // pred_check
          %p260 = pneg %p107
        $region34: #{tpu_custom_call.1} parent=23 // pred_check_branch
          %262 = sbr.rel (%p260) target = $region36
        $region35: #{tpu_custom_call.1} parent=23 // pred_region
          %s263 = sand.u32 %s21, 1
          %s264 = scalar_lea.sflag [#allocation7], %s263
          %s265 = sand.u32 %s97, 1
          %s266 = smul.addr %s265, 64
          %s267 = scalar_lea.vmem [#allocation8], %s266
          %s268 = smul.u32 16, %s28
          %s270 = ssub.s32 1024, 1024
          %271 = vsyncadd %s264, %s270
          %s272 = smul.addr %s268, 64
          %s273 = scalar_lea.hbm %s2, %s272
          %s274 = sshll.u32 %s267, 4
          %s275 = int_to_ptr.vmem [resolvable:$true] %s274
          %280 = dma.hbm_to_vmem [thread:$0]  %s273, 1024, %s275, %s264, 64, 64, 4
        $region36: #{tpu_custom_call.1} parent=23 // pred_fallthru
          _
      $region24: #{tpu_custom_call.1} parent=5 // pred_fallthru
        _
      %p281 = scmp.le.s32.totalorder 1, %s21
      %p282 = scmp.lt.s32.totalorder %s21, 10
      %p283 = pnand %p281, %p282
      %p284 = pneg %p283
      // Predicated region
      $region37: #{tpu_custom_call.1} parent=5 // pred_check
        _
      $region38: #{tpu_custom_call.1} parent=5 // pred_check_branch
        %286 = sbr.rel (%p283) target = $region40
      $region39: #{tpu_custom_call.1} parent=5 // pred_region
        %s287 = ssub.s32 %s21, 1
        %s288 = sand.u32 %s48, 1
        %s289 = scalar_lea.sflag [#allocation4], %s288
        %s290 = sand.u32 %s48, 1
        %s291 = smul.addr %s290, 64
        %s292 = scalar_lea.vmem [#allocation3], %s291
        // Predicated region
        $region41: #{tpu_custom_call.1} parent=39 // pred_check
          %p293 = pneg %p61
        $region42: #{tpu_custom_call.1} parent=39 // pred_check_branch
          %295 = sbr.rel (%p293) target = $region44
        $region43: #{tpu_custom_call.1} parent=39 // pred_region
          %296 = dma.done %s289, 1024
        $region44: #{tpu_custom_call.1} parent=39 // pred_fallthru
          _
        %s297 = sand.u32 %s26, 1
        %s298 = scalar_lea.sflag [#allocation7], %s297
        %s299 = sand.u32 %s74, 1
        %s300 = smul.addr %s299, 64
        %s301 = scalar_lea.vmem [#allocation6], %s300
        // Predicated region
        $region45: #{tpu_custom_call.1} parent=39 // pred_check
          %p302 = pneg %p87
        $region46: #{tpu_custom_call.1} parent=39 // pred_check_branch
          %304 = sbr.rel (%p302) target = $region48
        $region47: #{tpu_custom_call.1} parent=39 // pred_region
          %305 = dma.done %s298, 1024
        $region48: #{tpu_custom_call.1} parent=39 // pred_fallthru
          _
        %s306 = sand.u32 %s26, 1
        %s307 = scalar_lea.sflag [#allocation7], %s306
        %s308 = sand.u32 %s100, 1
        %s309 = smul.addr %s308, 64
        %s310 = scalar_lea.vmem [#allocation8], %s309
        // Predicated region
        $region49: #{tpu_custom_call.1} parent=39 // pred_check
          %p311 = pneg %p113
        $region50: #{tpu_custom_call.1} parent=39 // pred_check_branch
          %313 = sbr.rel (%p311) target = $region52
        $region51: #{tpu_custom_call.1} parent=39 // pred_region
          %314 = dma.done %s307, 1024
        $region52: #{tpu_custom_call.1} parent=39 // pred_fallthru
          _
        // Predicated region
        $region53: #{tpu_custom_call.1} parent=39 // pred_check
          %p315 = pneg %p134
        $region54: #{tpu_custom_call.1} parent=39 // pred_check_branch
          %317 = sbr.rel (%p315) target = $region56
        $region55: #{tpu_custom_call.1} parent=39 // pred_region
          %318 = dma.done [#allocation10], 2048
        $region56: #{tpu_custom_call.1} parent=39 // pred_fallthru
          _
        %s319 = sand.u32 %s48, 1
        %s320 = scalar_lea.sflag [#allocation4], %s319
        %s321 = sand.u32 %s48, 1
        %s322 = smul.addr %s321, 64
        %s323 = scalar_lea.vmem [#allocation3], %s322
        %p324 = pneg %p61
        %p325 = pneg %p58
        %s326 = sand.u32 %s26, 1
        %s327 = scalar_lea.sflag [#allocation7], %s326
        %s328 = sand.u32 %s74, 1
        %s329 = smul.addr %s328, 64
        %s330 = scalar_lea.vmem [#allocation6], %s329
        %p331 = pneg %p87
        %p332 = pneg %p84
        %s333 = sand.u32 %s26, 1
        %s334 = scalar_lea.sflag [#allocation7], %s333
        %s335 = sand.u32 %s100, 1
        %s336 = smul.addr %s335, 64
        %s337 = scalar_lea.vmem [#allocation8], %s336
        %p338 = pneg %p113
        %p339 = pneg %p110
        %p340 = pneg %p134
        %p341 = pneg %p131
        %p342 = pneg %p155
        %p343 = pneg %p152
        %p344 = pneg %p181
        %p345 = pneg %p178
        %s346 = sand.u32 %s168, 1
        %s347 = scalar_lea.sflag [#allocation5], %s346
        %s348 = sand.u32 %s168, 1
        %s349 = smul.addr %s348, 128
        %s350 = scalar_lea.vmem [#allocation11], %s349
        %s351 = smul.u32 16, %s30
        %s352 = smul.u32 16, %s31
        %s353 = smul.u32 16, %s30
        %s354 = smul.u32 16, %s30
        %p356 = scmp.eq.s32.totalorder %s31, 0
        // Predicated region
        $region57: #{tpu_custom_call.1} parent=39 // pred_check
          %p357 = pneg %p356
        $region58: #{tpu_custom_call.1} parent=39 // pred_check_branch
          %359 = sbr.rel (%p357) target = $region60
        $region59: #{tpu_custom_call.1} parent=39 // pred_region
          %360 = vst [vmem:[#allocation2] sm:$0xff] 0.0
          %361 = vst [vmem:[#allocation2 + $0x8] sm:$0xff] 0.0
          %362 = vst [vmem:[#allocation2 + $0x10] sm:$0xff] 0.0
          %363 = vst [vmem:[#allocation2 + $0x18] sm:$0xff] 0.0
          %364 = vst [vmem:[#allocation2 + $0x20] sm:$0xff] 0.0
          %365 = vst [vmem:[#allocation2 + $0x28] sm:$0xff] 0.0
          %366 = vst [vmem:[#allocation2 + $0x30] sm:$0xff] 0.0
          %367 = vst [vmem:[#allocation2 + $0x38] sm:$0xff] 0.0
          %368 = vst [vmem:[#allocation2 + $0x40] sm:$0xff] 0.0
          %369 = vst [vmem:[#allocation2 + $0x48] sm:$0xff] 0.0
          %370 = vst [vmem:[#allocation2 + $0x50] sm:$0xff] 0.0
          %371 = vst [vmem:[#allocation2 + $0x58] sm:$0xff] 0.0
          %372 = vst [vmem:[#allocation2 + $0x60] sm:$0xff] 0.0
          %373 = vst [vmem:[#allocation2 + $0x68] sm:$0xff] 0.0
          %374 = vst [vmem:[#allocation2 + $0x70] sm:$0xff] 0.0
          %375 = vst [vmem:[#allocation2 + $0x78] sm:$0xff] 0.0
        $region60: #{tpu_custom_call.1} parent=39 // pred_fallthru
          _
        %v376 = vld [vmem:[#allocation2] sm:$0xff]
        %v377 = vld [vmem:[#allocation2 + $0x8] sm:$0xff]
        %v378 = vld [vmem:[#allocation2 + $0x10] sm:$0xff]
        %v379 = vld [vmem:[#allocation2 + $0x18] sm:$0xff]
        %v380 = vld [vmem:[#allocation2 + $0x20] sm:$0xff]
        %v381 = vld [vmem:[#allocation2 + $0x28] sm:$0xff]
        %v382 = vld [vmem:[#allocation2 + $0x30] sm:$0xff]
        %v383 = vld [vmem:[#allocation2 + $0x38] sm:$0xff]
        %v384 = vld [vmem:[#allocation2 + $0x40] sm:$0xff]
        %v385 = vld [vmem:[#allocation2 + $0x48] sm:$0xff]
        %v386 = vld [vmem:[#allocation2 + $0x50] sm:$0xff]
        %v387 = vld [vmem:[#allocation2 + $0x58] sm:$0xff]
        %v388 = vld [vmem:[#allocation2 + $0x60] sm:$0xff]
        %v389 = vld [vmem:[#allocation2 + $0x68] sm:$0xff]
        %v390 = vld [vmem:[#allocation2 + $0x70] sm:$0xff]
        %v391 = vld [vmem:[#allocation2 + $0x78] sm:$0xff]
        %v392 = vld [vmem:[%s292] sm:$0xf]
        %v393 = vld [vmem:[%s292 + $0x4] sm:$0xf]
        %v394 = vld [vmem:[%s292 + $0x8] sm:$0xf]
        %v395 = vld [vmem:[%s292 + $0xc] sm:$0xf]
        %v396 = vld [vmem:[%s292 + $0x10] sm:$0xf]
        %v397 = vld [vmem:[%s292 + $0x14] sm:$0xf]
        %v398 = vld [vmem:[%s292 + $0x18] sm:$0xf]
        %v399 = vld [vmem:[%s292 + $0x1c] sm:$0xf]
        %v400 = vld [vmem:[%s292 + $0x20] sm:$0xf]
        %v401 = vld [vmem:[%s292 + $0x24] sm:$0xf]
        %v402 = vld [vmem:[%s292 + $0x28] sm:$0xf]
        %v403 = vld [vmem:[%s292 + $0x2c] sm:$0xf]
        %v404 = vld [vmem:[%s292 + $0x30] sm:$0xf]
        %v405 = vld [vmem:[%s292 + $0x34] sm:$0xf]
        %v406 = vld [vmem:[%s292 + $0x38] sm:$0xf]
        %v407 = vld [vmem:[%s292 + $0x3c] sm:$0xf]
        %v408 = vld [vmem:[%s301] sm:$0xf]
        %v409 = vld [vmem:[%s301 + $0x4] sm:$0xf]
        %v410 = vld [vmem:[%s301 + $0x8] sm:$0xf]
        %v411 = vld [vmem:[%s301 + $0xc] sm:$0xf]
        %v412 = vld [vmem:[%s301 + $0x10] sm:$0xf]
        %v413 = vld [vmem:[%s301 + $0x14] sm:$0xf]
        %v414 = vld [vmem:[%s301 + $0x18] sm:$0xf]
        %v415 = vld [vmem:[%s301 + $0x1c] sm:$0xf]
        %v416 = vld [vmem:[%s301 + $0x20] sm:$0xf]
        %v417 = vld [vmem:[%s301 + $0x24] sm:$0xf]
        %v418 = vld [vmem:[%s301 + $0x28] sm:$0xf]
        %v419 = vld [vmem:[%s301 + $0x2c] sm:$0xf]
        %v420 = vld [vmem:[%s301 + $0x30] sm:$0xf]
        %v421 = vld [vmem:[%s301 + $0x34] sm:$0xf]
        %v422 = vld [vmem:[%s301 + $0x38] sm:$0xf]
        %v423 = vld [vmem:[%s301 + $0x3c] sm:$0xf]
        %v440 = vunpack.c.l.b16 %v392
        %v441 = vunpack.c.l.b16 %v393
        %v442 = vunpack.c.l.b16 %v394
        %v443 = vunpack.c.l.b16 %v395
        %v444 = vunpack.c.l.b16 %v396
        %v445 = vunpack.c.l.b16 %v397
        %v446 = vunpack.c.l.b16 %v398
        %v447 = vunpack.c.l.b16 %v399
        %v448 = vunpack.c.l.b16 %v400
        %v449 = vunpack.c.l.b16 %v401
        %v450 = vunpack.c.l.b16 %v402
        %v451 = vunpack.c.l.b16 %v403
        %v452 = vunpack.c.l.b16 %v404
        %v453 = vunpack.c.l.b16 %v405
        %v454 = vunpack.c.l.b16 %v406
        %v455 = vunpack.c.l.b16 %v407
        %v456 = vpack.c.b16 %v441, %v440
        %v457 = vpack.c.b16 %v443, %v442
        %v458 = vpack.c.b16 %v445, %v444
        %v459 = vpack.c.b16 %v447, %v446
        %v460 = vpack.c.b16 %v449, %v448
        %v461 = vpack.c.b16 %v451, %v450
        %v462 = vpack.c.b16 %v453, %v452
        %v463 = vpack.c.b16 %v455, %v454
        %v488 = vunpack.c.l.b16 %v408
        %v489 = vunpack.c.l.b16 %v409
        %v490 = vunpack.c.l.b16 %v410
        %v491 = vunpack.c.l.b16 %v411
        %v492 = vunpack.c.l.b16 %v412
        %v493 = vunpack.c.l.b16 %v413
        %v494 = vunpack.c.l.b16 %v414
        %v495 = vunpack.c.l.b16 %v415
        %v496 = vunpack.c.l.b16 %v416
        %v497 = vunpack.c.l.b16 %v417
        %v498 = vunpack.c.l.b16 %v418
        %v499 = vunpack.c.l.b16 %v419
        %v500 = vunpack.c.l.b16 %v420
        %v501 = vunpack.c.l.b16 %v421
        %v502 = vunpack.c.l.b16 %v422
        %v503 = vunpack.c.l.b16 %v423
        %v504 = vpack.c.b16 %v489, %v488
        %v505 = vpack.c.b16 %v491, %v490
        %v506 = vpack.c.b16 %v493, %v492
        %v507 = vpack.c.b16 %v495, %v494
        %v508 = vpack.c.b16 %v497, %v496
        %v509 = vpack.c.b16 %v499, %v498
        %v510 = vpack.c.b16 %v501, %v500
        %v511 = vpack.c.b16 %v503, %v502
        %520 = vmatprep.subr.bf16.mxu0 0
        %521 = vmatpush1.bf16.msra.mxu0 %v511
        %522 = vmatprep.subr.bf16.mxu0 0
        %523 = vmatpush1.bf16.msra.mxu0 %v510
        %524 = vmatprep.subr.bf16.mxu0 0
        %525 = vmatpush1.bf16.msra.mxu0 %v509
        %526 = vmatprep.subr.bf16.mxu0 0
        %527 = vmatpush1.bf16.msra.mxu0 %v508
        %528 = vmatprep.subr.bf16.mxu0 0
        %529 = vmatpush1.bf16.msra.mxu0 %v507
        %530 = vmatprep.subr.bf16.mxu0 0
        %531 = vmatpush1.bf16.msra.mxu0 %v506
        %532 = vmatprep.subr.bf16.mxu0 0
        %533 = vmatpush1.bf16.msra.mxu0 %v505
        %534 = vmatprep.subr.bf16.mxu0 0
        %535 = vmatpush1.bf16.msra.mxu0 %v504
        %536 = vmatprep.subr.bf16.mxu0 0
        %537 = vmatpush2.bf16.msra.mxu0 0
        %538 = vmatprep.subr.bf16.mxu0 0
        %539 = vmatpush2.bf16.msra.mxu0 0
        %540 = vmatprep.subr.bf16.mxu0 0
        %541 = vmatpush2.bf16.msra.mxu0 0
        %542 = vmatprep.subr.bf16.mxu0 0
        %543 = vmatpush2.bf16.msra.mxu0 0
        %544 = vmatprep.subr.bf16.mxu0 0
        %545 = vmatpush2.bf16.msra.mxu0 0
        %546 = vmatprep.subr.bf16.mxu0 0
        %547 = vmatpush2.bf16.msra.mxu0 0
        %548 = vmatprep.subr.bf16.mxu0 0
        %549 = vmatpush2.bf16.msra.mxu0 0
        %550 = vmatprep.subr.bf16.mxu0 0
        %551 = vmatpush2.bf16.msra.mxu0 0
        %552 = vmatprep.mubr.bf16.mxu0 0
        %553 = vmatmul.mubr.bf16.gmra.mxu0 %v456
        %v554 = vpop.f32.mrf.mxu0
        %v555 = vadd.f32 0.0, %v554
        %v556 = vpop.f32.mrf.mxu0
        %v557 = vpop.f32.mrf.mxu0
        %v558 = vadd.f32 0.0, %v557
        %v559 = vpop.f32.mrf.mxu0
        %560 = vmatprep.mubr.bf16.mxu0 0
        %561 = vmatmul.mubr.bf16.gmra.mxu0 %v457
        %v562 = vpop.f32.mrf.mxu0
        %v563 = vadd.f32 0.0, %v562
        %v564 = vpop.f32.mrf.mxu0
        %v565 = vpop.f32.mrf.mxu0
        %v566 = vadd.f32 0.0, %v565
        %v567 = vpop.f32.mrf.mxu0
        %568 = vmatprep.mubr.bf16.mxu0 0
        %569 = vmatmul.mubr.bf16.gmra.mxu0 %v458
        %v570 = vpop.f32.mrf.mxu0
        %v571 = vadd.f32 0.0, %v570
        %v572 = vpop.f32.mrf.mxu0
        %v573 = vpop.f32.mrf.mxu0
        %v574 = vadd.f32 0.0, %v573
        %v575 = vpop.f32.mrf.mxu0
        %576 = vmatprep.mubr.bf16.mxu0 0
        %577 = vmatmul.mubr.bf16.gmra.mxu0 %v459
        %v578 = vpop.f32.mrf.mxu0
        %v579 = vadd.f32 0.0, %v578
        %v580 = vpop.f32.mrf.mxu0
        %v581 = vpop.f32.mrf.mxu0
        %v582 = vadd.f32 0.0, %v581
        %v583 = vpop.f32.mrf.mxu0
        %584 = vmatprep.mubr.bf16.mxu0 0
        %585 = vmatmul.mubr.bf16.gmra.mxu0 %v460
        %v586 = vpop.f32.mrf.mxu0
        %v587 = vadd.f32 0.0, %v586
        %v588 = vpop.f32.mrf.mxu0
        %v589 = vpop.f32.mrf.mxu0
        %v590 = vadd.f32 0.0, %v589
        %v591 = vpop.f32.mrf.mxu0
        %592 = vmatprep.mubr.bf16.mxu0 0
        %593 = vmatmul.mubr.bf16.gmra.mxu0 %v461
        %v594 = vpop.f32.mrf.mxu0
        %v595 = vadd.f32 0.0, %v594
        %v596 = vpop.f32.mrf.mxu0
        %v597 = vpop.f32.mrf.mxu0
        %v598 = vadd.f32 0.0, %v597
        %v599 = vpop.f32.mrf.mxu0
        %600 = vmatprep.mubr.bf16.mxu0 0
        %601 = vmatmul.mubr.bf16.gmra.mxu0 %v462
        %v602 = vpop.f32.mrf.mxu0
        %v603 = vadd.f32 0.0, %v602
        %v604 = vpop.f32.mrf.mxu0
        %v605 = vpop.f32.mrf.mxu0
        %v606 = vadd.f32 0.0, %v605
        %v607 = vpop.f32.mrf.mxu0
        %608 = vmatprep.mubr.bf16.mxu0 0
        %609 = vmatmul.mubr.bf16.gmra.mxu0 %v463
        %v610 = vpop.f32.mrf.mxu0
        %v611 = vadd.f32 0.0, %v610
        %v612 = vpop.f32.mrf.mxu0
        %v613 = vpop.f32.mrf.mxu0
        %v614 = vadd.f32 0.0, %v613
        %v615 = vpop.f32.mrf.mxu0
        %616 = vdwg.mxu0
        %v617 = vadd.f32 %v376, %v555
        %v618 = vadd.f32 %v377, %v558
        %v619 = vadd.f32 %v378, %v563
        %v620 = vadd.f32 %v379, %v566
        %v621 = vadd.f32 %v380, %v571
        %v622 = vadd.f32 %v381, %v574
        %v623 = vadd.f32 %v382, %v579
        %v624 = vadd.f32 %v383, %v582
        %v625 = vadd.f32 %v384, %v587
        %v626 = vadd.f32 %v385, %v590
        %v627 = vadd.f32 %v386, %v595
        %v628 = vadd.f32 %v387, %v598
        %v629 = vadd.f32 %v388, %v603
        %v630 = vadd.f32 %v389, %v606
        %v631 = vadd.f32 %v390, %v611
        %v632 = vadd.f32 %v391, %v614
        %633 = vst [vmem:[#allocation2] sm:$0xff] %v617
        %634 = vst [vmem:[#allocation2 + $0x8] sm:$0xff] %v618
        %635 = vst [vmem:[#allocation2 + $0x10] sm:$0xff] %v619
        %636 = vst [vmem:[#allocation2 + $0x18] sm:$0xff] %v620
        %637 = vst [vmem:[#allocation2 + $0x20] sm:$0xff] %v621
        %638 = vst [vmem:[#allocation2 + $0x28] sm:$0xff] %v622
        %639 = vst [vmem:[#allocation2 + $0x30] sm:$0xff] %v623
        %640 = vst [vmem:[#allocation2 + $0x38] sm:$0xff] %v624
        %641 = vst [vmem:[#allocation2 + $0x40] sm:$0xff] %v625
        %642 = vst [vmem:[#allocation2 + $0x48] sm:$0xff] %v626
        %643 = vst [vmem:[#allocation2 + $0x50] sm:$0xff] %v627
        %644 = vst [vmem:[#allocation2 + $0x58] sm:$0xff] %v628
        %645 = vst [vmem:[#allocation2 + $0x60] sm:$0xff] %v629
        %646 = vst [vmem:[#allocation2 + $0x68] sm:$0xff] %v630
        %647 = vst [vmem:[#allocation2 + $0x70] sm:$0xff] %v631
        %648 = vst [vmem:[#allocation2 + $0x78] sm:$0xff] %v632
        %p649 = scmp.eq.s32.totalorder %s31, 2
        // Predicated region
        $region61: #{tpu_custom_call.1} parent=39 // pred_check
          %p650 = pneg %p649
        $region62: #{tpu_custom_call.1} parent=39 // pred_check_branch
          %652 = sbr.rel (%p650) target = $region64
        $region63: #{tpu_custom_call.1} parent=39 // pred_region
          %v653 = vld [vmem:[#allocation2] sm:$0xff]
          %v654 = vld [vmem:[#allocation2 + $0x8] sm:$0xff]
          %v655 = vld [vmem:[#allocation2 + $0x10] sm:$0xff]
          %v656 = vld [vmem:[#allocation2 + $0x18] sm:$0xff]
          %v657 = vld [vmem:[#allocation2 + $0x20] sm:$0xff]
          %v658 = vld [vmem:[#allocation2 + $0x28] sm:$0xff]
          %v659 = vld [vmem:[#allocation2 + $0x30] sm:$0xff]
          %v660 = vld [vmem:[#allocation2 + $0x38] sm:$0xff]
          %v661 = vld [vmem:[#allocation2 + $0x40] sm:$0xff]
          %v662 = vld [vmem:[#allocation2 + $0x48] sm:$0xff]
          %v663 = vld [vmem:[#allocation2 + $0x50] sm:$0xff]
          %v664 = vld [vmem:[#allocation2 + $0x58] sm:$0xff]
          %v665 = vld [vmem:[#allocation2 + $0x60] sm:$0xff]
          %v666 = vld [vmem:[#allocation2 + $0x68] sm:$0xff]
          %v667 = vld [vmem:[#allocation2 + $0x70] sm:$0xff]
          %v668 = vld [vmem:[#allocation2 + $0x78] sm:$0xff]
          %v669 = vld [vmem:[%s310] sm:$0xf]
          %v670 = vld [vmem:[%s310 + $0x4] sm:$0xf]
          %v671 = vld [vmem:[%s310 + $0x8] sm:$0xf]
          %v672 = vld [vmem:[%s310 + $0xc] sm:$0xf]
          %v673 = vld [vmem:[%s310 + $0x10] sm:$0xf]
          %v674 = vld [vmem:[%s310 + $0x14] sm:$0xf]
          %v675 = vld [vmem:[%s310 + $0x18] sm:$0xf]
          %v676 = vld [vmem:[%s310 + $0x1c] sm:$0xf]
          %v677 = vld [vmem:[%s310 + $0x20] sm:$0xf]
          %v678 = vld [vmem:[%s310 + $0x24] sm:$0xf]
          %v679 = vld [vmem:[%s310 + $0x28] sm:$0xf]
          %v680 = vld [vmem:[%s310 + $0x2c] sm:$0xf]
          %v681 = vld [vmem:[%s310 + $0x30] sm:$0xf]
          %v682 = vld [vmem:[%s310 + $0x34] sm:$0xf]
          %v683 = vld [vmem:[%s310 + $0x38] sm:$0xf]
          %v684 = vld [vmem:[%s310 + $0x3c] sm:$0xf]
          %v685 = vunpack.c.l.bf16 %v669
          %v686 = vunpack.c.l.bf16 %v670
          %v687 = vunpack.c.l.bf16 %v671
          %v688 = vunpack.c.l.bf16 %v672
          %v689 = vunpack.c.l.bf16 %v673
          %v690 = vunpack.c.l.bf16 %v674
          %v691 = vunpack.c.l.bf16 %v675
          %v692 = vunpack.c.l.bf16 %v676
          %v693 = vunpack.c.l.bf16 %v677
          %v694 = vunpack.c.l.bf16 %v678
          %v695 = vunpack.c.l.bf16 %v679
          %v696 = vunpack.c.l.bf16 %v680
          %v697 = vunpack.c.l.bf16 %v681
          %v698 = vunpack.c.l.bf16 %v682
          %v699 = vunpack.c.l.bf16 %v683
          %v700 = vunpack.c.l.bf16 %v684
          %v701 = vadd.f32 %v653, %v685
          %v702 = vadd.f32 %v654, %v686
          %v703 = vadd.f32 %v655, %v687
          %v704 = vadd.f32 %v656, %v688
          %v705 = vadd.f32 %v657, %v689
          %v706 = vadd.f32 %v658, %v690
          %v707 = vadd.f32 %v659, %v691
          %v708 = vadd.f32 %v660, %v692
          %v709 = vadd.f32 %v661, %v693
          %v710 = vadd.f32 %v662, %v694
          %v711 = vadd.f32 %v663, %v695
          %v712 = vadd.f32 %v664, %v696
          %v713 = vadd.f32 %v665, %v697
          %v714 = vadd.f32 %v666, %v698
          %v715 = vadd.f32 %v667, %v699
          %v716 = vadd.f32 %v668, %v700
          %v717 = vrcp.pop %v701
          %v718 = vrcp.pop %v702
          %v719 = vrcp.pop %v703
          %v720 = vrcp.pop %v704
          %v721 = vrcp.pop %v705
          %v722 = vrcp.pop %v706
          %v723 = vrcp.pop %v707
          %v724 = vrcp.pop %v708
          %v725 = vrcp.pop %v709
          %v726 = vrcp.pop %v710
          %v727 = vrcp.pop %v711
          %v728 = vrcp.pop %v712
          %v729 = vrcp.pop %v713
          %v730 = vrcp.pop %v714
          %v731 = vrcp.pop %v715
          %v732 = vrcp.pop %v716
          %734 = vset.pattern.permute.xlu0 32
          %735 = vperm.xlu0 %734, %v717
          %v736 = vpop.permute.xlu0 %735
          %739 = vset.pattern.permute.xlu0 32
          %740 = vperm.xlu0 %739, %v718
          %v741 = vpop.permute.xlu0 %740
          %744 = vset.pattern.permute.xlu0 32
          %745 = vperm.xlu0 %744, %v719
          %v746 = vpop.permute.xlu0 %745
          %749 = vset.pattern.permute.xlu0 32
          %750 = vperm.xlu0 %749, %v720
          %v751 = vpop.permute.xlu0 %750
          %754 = vset.pattern.permute.xlu0 32
          %755 = vperm.xlu0 %754, %v721
          %v756 = vpop.permute.xlu0 %755
          %759 = vset.pattern.permute.xlu0 32
          %760 = vperm.xlu0 %759, %v722
          %v761 = vpop.permute.xlu0 %760
          %764 = vset.pattern.permute.xlu0 32
          %765 = vperm.xlu0 %764, %v723
          %v766 = vpop.permute.xlu0 %765
          %769 = vset.pattern.permute.xlu0 32
          %770 = vperm.xlu0 %769, %v724
          %v771 = vpop.permute.xlu0 %770
          %774 = vset.pattern.permute.xlu0 32
          %775 = vperm.xlu0 %774, %v725
          %v776 = vpop.permute.xlu0 %775
          %779 = vset.pattern.permute.xlu0 32
          %780 = vperm.xlu0 %779, %v726
          %v781 = vpop.permute.xlu0 %780
          %784 = vset.pattern.permute.xlu0 32
          %785 = vperm.xlu0 %784, %v727
          %v786 = vpop.permute.xlu0 %785
          %789 = vset.pattern.permute.xlu0 32
          %790 = vperm.xlu0 %789, %v728
          %v791 = vpop.permute.xlu0 %790
          %794 = vset.pattern.permute.xlu0 32
          %795 = vperm.xlu0 %794, %v729
          %v796 = vpop.permute.xlu0 %795
          %799 = vset.pattern.permute.xlu0 32
          %800 = vperm.xlu0 %799, %v730
          %v801 = vpop.permute.xlu0 %800
          %804 = vset.pattern.permute.xlu0 32
          %805 = vperm.xlu0 %804, %v731
          %v806 = vpop.permute.xlu0 %805
          %809 = vset.pattern.permute.xlu0 32
          %810 = vperm.xlu0 %809, %v732
          %v811 = vpop.permute.xlu0 %810
          %v813 = vmul.f32 %v701, %v736
          %v814 = vmul.f32 %v702, %v741
          %v815 = vmul.f32 %v703, %v746
          %v816 = vmul.f32 %v704, %v751
          %v817 = vmul.f32 %v705, %v756
          %v818 = vmul.f32 %v706, %v761
          %v819 = vmul.f32 %v707, %v766
          %v820 = vmul.f32 %v708, %v771
          %v821 = vmul.f32 %v709, %v776
          %v822 = vmul.f32 %v710, %v781
          %v823 = vmul.f32 %v711, %v786
          %v824 = vmul.f32 %v712, %v791
          %v825 = vmul.f32 %v713, %v796
          %v826 = vmul.f32 %v714, %v801
          %v827 = vmul.f32 %v715, %v806
          %v828 = vmul.f32 %v716, %v811
          %v829 = vld [vmem:[#allocation9] sm:$0xff]
          %v830 = vld [vmem:[#allocation9 + $0x8] sm:$0xff]
          %v831 = vld [vmem:[#allocation9 + $0x10] sm:$0xff]
          %v832 = vld [vmem:[#allocation9 + $0x18] sm:$0xff]
          %v833 = vld [vmem:[#allocation9 + $0x20] sm:$0xff]
          %v834 = vld [vmem:[#allocation9 + $0x28] sm:$0xff]
          %v835 = vld [vmem:[#allocation9 + $0x30] sm:$0xff]
          %v836 = vld [vmem:[#allocation9 + $0x38] sm:$0xff]
          %v837 = vld [vmem:[#allocation9 + $0x40] sm:$0xff]
          %v838 = vld [vmem:[#allocation9 + $0x48] sm:$0xff]
          %v839 = vld [vmem:[#allocation9 + $0x50] sm:$0xff]
          %v840 = vld [vmem:[#allocation9 + $0x58] sm:$0xff]
          %v841 = vld [vmem:[#allocation9 + $0x60] sm:$0xff]
          %v842 = vld [vmem:[#allocation9 + $0x68] sm:$0xff]
          %v843 = vld [vmem:[#allocation9 + $0x70] sm:$0xff]
          %v844 = vld [vmem:[#allocation9 + $0x78] sm:$0xff]
          %v845 = vld [vmem:[%s4] sm:$0x1]
          %v847 = vlaneseq
          %v848 = vshrl.u32 %v847, 7
          %v849 = vsub.s32 0, %v848
          %v850 = vrot.slane %v845, %v849
          %852 = vmatprep.subr.mxu0 0.0
          %853 = vmatpush1.msra.mxu0 %v844
          %854 = vmatprep.subr.mxu0 0.0
          %855 = vmatpush1.msra.mxu0 %v843
          %856 = vmatprep.subr.mxu0 0.0
          %857 = vmatpush1.msra.mxu0 %v842
          %858 = vmatprep.subr.mxu0 0.0
          %859 = vmatpush1.msra.mxu0 %v841
          %860 = vmatprep.subr.mxu0 0.0
          %861 = vmatpush1.msra.mxu0 %v840
          %862 = vmatprep.subr.mxu0 0.0
          %863 = vmatpush1.msra.mxu0 %v839
          %864 = vmatprep.subr.mxu0 0.0
          %865 = vmatpush1.msra.mxu0 %v838
          %866 = vmatprep.subr.mxu0 0.0
          %867 = vmatpush1.msra.mxu0 %v837
          %868 = vmatprep.subr.mxu0 0.0
          %869 = vmatpush1.msra.mxu0 %v836
          %870 = vmatprep.subr.mxu0 0.0
          %871 = vmatpush1.msra.mxu0 %v835
          %872 = vmatprep.subr.mxu0 0.0
          %873 = vmatpush1.msra.mxu0 %v834
          %874 = vmatprep.subr.mxu0 0.0
          %875 = vmatpush1.msra.mxu0 %v833
          %876 = vmatprep.subr.mxu0 0.0
          %877 = vmatpush1.msra.mxu0 %v832
          %878 = vmatprep.subr.mxu0 0.0
          %879 = vmatpush1.msra.mxu0 %v831
          %880 = vmatprep.subr.mxu0 0.0
          %881 = vmatpush1.msra.mxu0 %v830
          %882 = vmatprep.subr.mxu0 0.0
          %883 = vmatpush1.msra.mxu0 %v829
          %884 = vmatprep.subr.mxu0 0.0
          %885 = vmatpush2.msra.mxu0 0.0
          %886 = vmatprep.subr.mxu0 0.0
          %887 = vmatpush2.msra.mxu0 0.0
          %888 = vmatprep.subr.mxu0 0.0
          %889 = vmatpush2.msra.mxu0 0.0
          %890 = vmatprep.subr.mxu0 0.0
          %891 = vmatpush2.msra.mxu0 0.0
          %892 = vmatprep.subr.mxu0 0.0
          %893 = vmatpush2.msra.mxu0 0.0
          %894 = vmatprep.subr.mxu0 0.0
          %895 = vmatpush2.msra.mxu0 0.0
          %896 = vmatprep.subr.mxu0 0.0
          %897 = vmatpush2.msra.mxu0 0.0
          %898 = vmatprep.subr.mxu0 0.0
          %899 = vmatpush2.msra.mxu0 0.0
          %900 = vmatprep.subr.mxu0 0.0
          %901 = vmatpush2.msra.mxu0 0.0
          %902 = vmatprep.subr.mxu0 0.0
          %903 = vmatpush2.msra.mxu0 0.0
          %904 = vmatprep.subr.mxu0 0.0
          %905 = vmatpush2.msra.mxu0 0.0
          %906 = vmatprep.subr.mxu0 0.0
          %907 = vmatpush2.msra.mxu0 0.0
          %908 = vmatprep.subr.mxu0 0.0
          %909 = vmatpush2.msra.mxu0 0.0
          %910 = vmatprep.subr.mxu0 0.0
          %911 = vmatpush2.msra.mxu0 0.0
          %912 = vmatprep.subr.mxu0 0.0
          %913 = vmatpush2.msra.mxu0 0.0
          %914 = vmatprep.subr.mxu0 0.0
          %915 = vmatpush2.msra.mxu0 0.0
          %916 = vmatprep.mubr.f32.mxu0 0.0
          %917 = vmatmul.mubr.f32.gmra.mxu0 %v813
          %v918 = vpop.f32.mrf.mxu0
          %v919 = vadd.f32 %v850, %v918
          %v920 = vpop.f32.mrf.mxu0
          %921 = vmatprep.mubr.f32.mxu0 0.0
          %922 = vmatmul.mubr.f32.gmra.mxu0 %v814
          %v923 = vpop.f32.mrf.mxu0
          %v924 = vadd.f32 %v850, %v923
          %v925 = vpop.f32.mrf.mxu0
          %926 = vmatprep.mubr.f32.mxu0 0.0
          %927 = vmatmul.mubr.f32.gmra.mxu0 %v815
          %v928 = vpop.f32.mrf.mxu0
          %v929 = vadd.f32 %v850, %v928
          %v930 = vpop.f32.mrf.mxu0
          %931 = vmatprep.mubr.f32.mxu0 0.0
          %932 = vmatmul.mubr.f32.gmra.mxu0 %v816
          %v933 = vpop.f32.mrf.mxu0
          %v934 = vadd.f32 %v850, %v933
          %v935 = vpop.f32.mrf.mxu0
          %936 = vmatprep.mubr.f32.mxu0 0.0
          %937 = vmatmul.mubr.f32.gmra.mxu0 %v817
          %v938 = vpop.f32.mrf.mxu0
          %v939 = vadd.f32 %v850, %v938
          %v940 = vpop.f32.mrf.mxu0
          %941 = vmatprep.mubr.f32.mxu0 0.0
          %942 = vmatmul.mubr.f32.gmra.mxu0 %v818
          %v943 = vpop.f32.mrf.mxu0
          %v944 = vadd.f32 %v850, %v943
          %v945 = vpop.f32.mrf.mxu0
          %946 = vmatprep.mubr.f32.mxu0 0.0
          %947 = vmatmul.mubr.f32.gmra.mxu0 %v819
          %v948 = vpop.f32.mrf.mxu0
          %v949 = vadd.f32 %v850, %v948
          %v950 = vpop.f32.mrf.mxu0
          %951 = vmatprep.mubr.f32.mxu0 0.0
          %952 = vmatmul.mubr.f32.gmra.mxu0 %v820
          %v953 = vpop.f32.mrf.mxu0
          %v954 = vadd.f32 %v850, %v953
          %v955 = vpop.f32.mrf.mxu0
          %956 = vmatprep.mubr.f32.mxu0 0.0
          %957 = vmatmul.mubr.f32.gmra.mxu0 %v821
          %v958 = vpop.f32.mrf.mxu0
          %v959 = vadd.f32 %v850, %v958
          %v960 = vpop.f32.mrf.mxu0
          %961 = vmatprep.mubr.f32.mxu0 0.0
          %962 = vmatmul.mubr.f32.gmra.mxu0 %v822
          %v963 = vpop.f32.mrf.mxu0
          %v964 = vadd.f32 %v850, %v963
          %v965 = vpop.f32.mrf.mxu0
          %966 = vmatprep.mubr.f32.mxu0 0.0
          %967 = vmatmul.mubr.f32.gmra.mxu0 %v823
          %v968 = vpop.f32.mrf.mxu0
          %v969 = vadd.f32 %v850, %v968
          %v970 = vpop.f32.mrf.mxu0
          %971 = vmatprep.mubr.f32.mxu0 0.0
          %972 = vmatmul.mubr.f32.gmra.mxu0 %v824
          %v973 = vpop.f32.mrf.mxu0
          %v974 = vadd.f32 %v850, %v973
          %v975 = vpop.f32.mrf.mxu0
          %976 = vmatprep.mubr.f32.mxu0 0.0
          %977 = vmatmul.mubr.f32.gmra.mxu0 %v825
          %v978 = vpop.f32.mrf.mxu0
          %v979 = vadd.f32 %v850, %v978
          %v980 = vpop.f32.mrf.mxu0
          %981 = vmatprep.mubr.f32.mxu0 0.0
          %982 = vmatmul.mubr.f32.gmra.mxu0 %v826
          %v983 = vpop.f32.mrf.mxu0
          %v984 = vadd.f32 %v850, %v983
          %v985 = vpop.f32.mrf.mxu0
          %986 = vmatprep.mubr.f32.mxu0 0.0
          %987 = vmatmul.mubr.f32.gmra.mxu0 %v827
          %v988 = vpop.f32.mrf.mxu0
          %v989 = vadd.f32 %v850, %v988
          %v990 = vpop.f32.mrf.mxu0
          %991 = vmatprep.mubr.f32.mxu0 0.0
          %992 = vmatmul.mubr.f32.gmra.mxu0 %v828
          %v993 = vpop.f32.mrf.mxu0
          %v994 = vadd.f32 %v850, %v993
          %v995 = vpop.f32.mrf.mxu0
          %996 = vdwg.mxu0
          %v997 = vmax.f32 %v919, 0.0
          %v998 = vmax.f32 %v924, 0.0
          %v999 = vmax.f32 %v929, 0.0
          %v1000 = vmax.f32 %v934, 0.0
          %v1001 = vmax.f32 %v939, 0.0
          %v1002 = vmax.f32 %v944, 0.0
          %v1003 = vmax.f32 %v949, 0.0
          %v1004 = vmax.f32 %v954, 0.0
          %v1005 = vmax.f32 %v959, 0.0
          %v1006 = vmax.f32 %v964, 0.0
          %v1007 = vmax.f32 %v969, 0.0
          %v1008 = vmax.f32 %v974, 0.0
          %v1009 = vmax.f32 %v979, 0.0
          %v1010 = vmax.f32 %v984, 0.0
          %v1011 = vmax.f32 %v989, 0.0
          %v1012 = vmax.f32 %v994, 0.0
          %1013 = vst [vmem:[%s350] sm:$0xff] %v997
          %1014 = vst [vmem:[%s350 + $0x8] sm:$0xff] %v998
          %1015 = vst [vmem:[%s350 + $0x10] sm:$0xff] %v999
          %1016 = vst [vmem:[%s350 + $0x18] sm:$0xff] %v1000
          %1017 = vst [vmem:[%s350 + $0x20] sm:$0xff] %v1001
          %1018 = vst [vmem:[%s350 + $0x28] sm:$0xff] %v1002
          %1019 = vst [vmem:[%s350 + $0x30] sm:$0xff] %v1003
          %1020 = vst [vmem:[%s350 + $0x38] sm:$0xff] %v1004
          %1021 = vst [vmem:[%s350 + $0x40] sm:$0xff] %v1005
          %1022 = vst [vmem:[%s350 + $0x48] sm:$0xff] %v1006
          %1023 = vst [vmem:[%s350 + $0x50] sm:$0xff] %v1007
          %1024 = vst [vmem:[%s350 + $0x58] sm:$0xff] %v1008
          %1025 = vst [vmem:[%s350 + $0x60] sm:$0xff] %v1009
          %1026 = vst [vmem:[%s350 + $0x68] sm:$0xff] %v1010
          %1027 = vst [vmem:[%s350 + $0x70] sm:$0xff] %v1011
          %1028 = vst [vmem:[%s350 + $0x78] sm:$0xff] %v1012
        $region64: #{tpu_custom_call.1} parent=39 // pred_fallthru
          _
        %s1029 = sand.u32 %s168, 1
        %s1030 = scalar_lea.sflag [#allocation5], %s1029
        %s1031 = sand.u32 %s168, 1
        %s1032 = smul.addr %s1031, 128
        %s1033 = scalar_lea.vmem [#allocation11], %s1032
        // Predicated region
        $region65: #{tpu_custom_call.1} parent=39 // pred_check
          %p1034 = pneg %p178
        $region66: #{tpu_custom_call.1} parent=39 // pred_check_branch
          %1036 = sbr.rel (%p1034) target = $region68
        $region67: #{tpu_custom_call.1} parent=39 // pred_region
          %s1037 = smul.u32 16, %s30
          %s1039 = ssub.s32 2048, 2048
          %1040 = vsyncadd %s1030, %s1039
          %s1041 = smul.addr %s1037, 128
          %s1042 = scalar_lea.hbm %s5, %s1041
          %s1043 = sshll.u32 %s1033, 4
          %s1044 = int_to_ptr.vmem [resolvable:$true] %s1043
          %1049 = dma.vmem_to_hbm [thread:$0]  %s1044, 2048, %s1042, %s1030, 128, 128, 8
        $region68: #{tpu_custom_call.1} parent=39 // pred_fallthru
          _
      $region40: #{tpu_custom_call.1} parent=5 // pred_fallthru
        _
      %p1050 = scmp.le.s32.totalorder 2, %s21
      // Predicated region
      $region69: #{tpu_custom_call.1} parent=5 // pred_check
        %p1051 = pneg %p1050
      $region70: #{tpu_custom_call.1} parent=5 // pred_check_branch
        %1053 = sbr.rel (%p1051) target = $region72
      $region71: #{tpu_custom_call.1} parent=5 // pred_region
        %s1054 = ssub.s32 %s21, 2
        // Predicated region
        $region73: #{tpu_custom_call.1} parent=71 // pred_check
          %p1055 = pneg %p184
        $region74: #{tpu_custom_call.1} parent=71 // pred_check_branch
          %1057 = sbr.rel (%p1055) target = $region76
        $region75: #{tpu_custom_call.1} parent=71 // pred_region
          %s1058 = sand.u32 %s169, 1
          %s1059 = scalar_lea.sflag [#allocation5], %s1058
          %s1060 = sand.u32 %s169, 1
          %s1061 = smul.addr %s1060, 128
          %s1062 = scalar_lea.vmem [#allocation11], %s1061
          %1063 = dma.done %s1059, 2048
        $region76: #{tpu_custom_call.1} parent=71 // pred_fallthru
          _
      $region72: #{tpu_custom_call.1} parent=5 // pred_fallthru
        _
    $region6: #{tpu_custom_call.1} parent=1 // loop_footer
      %s25 = sadd.s32 1, %s21
    $region7: #{tpu_custom_call.1} parent=1 // loop_footer_branch
      %20 = sbr.rel target = $region3
    $region8: #{tpu_custom_call.1} parent=1 // loop_exit
      _
    %1064 = vsyncpa [#allocation4], 1
    %s1065 = scalar_lea.sflag [#allocation4], 1
    %1066 = vsyncpa %s1065, 1
    %1067 = vsyncpa [#allocation7], 1
    %s1068 = scalar_lea.sflag [#allocation7], 1
    %1069 = vsyncpa %s1068, 1
    %1070 = vsyncpa [#allocation10], 1
    %1071 = vsyncpa [#allocation5], 1
    %s1072 = scalar_lea.sflag [#allocation5], 1
    %1073 = vsyncpa %s1072, 1

</llo_original>
